<compile_context>
chip_gen: v7x
topology: tpu7x:2x2x1
jax: 0.10.0
libtpu: 0.0.40
codegen_flags: <defaults>
</compile_context>

<pallas_src>
import functools

import jax
import jax.numpy as jnp
from jax import lax
from jax.experimental import pallas as pl
from jax.experimental.pallas import tpu as pltpu

_LANE = 128
_SUBLANE = 8


def _round_up(n, m):
    return ((n + m - 1) // m) * m


# ----------------------------------------------------------------------------
# Fused kernel: fc1 -> hidden chain -> classifier for one batch tile.
# All weight refs are whole-array VMEM residents (constant index_map).
# ----------------------------------------------------------------------------
def _net_fused_kernel(x_ref, w1_ref, b1_ref, hw_ref, hb_ref, cw_ref, cb_ref,
                      o_ref, *, num_hidden):
    # fc1 block: tanh(x @ W1 + b1). bf16 x bf16 on the MXU, f32 accumulate.
    h = jnp.tanh(
        jnp.dot(x_ref[...].astype(jnp.bfloat16), w1_ref[...],
                preferred_element_type=jnp.float32) + b1_ref[...])

    # Hidden chain: the whole (L-1, W, W) weight stack is resident in VMEM.
    # Fully unrolled loop -> zero grid / control-flow overhead per layer.
    def layer_body(l, h):
        y = jnp.dot(h.astype(jnp.bfloat16), hw_ref[l],
                    preferred_element_type=jnp.float32) + hb_ref[l]
        return jnp.tanh(y)

    if num_hidden > 0:
        h = lax.fori_loop(0, num_hidden, layer_body, h, unroll=True)

    # Classifier, lane-padded to 128 so the output store is lane-dense
    # (unmasked vst). The wrapper slices back to num_classes.
    o_ref[...] = (jnp.dot(h.astype(jnp.bfloat16), cw_ref[...],
                          preferred_element_type=jnp.float32)
                  + cb_ref[...]).astype(o_ref.dtype)


def net_forward_pallas(params, x2d, num_classes, *, batch_tile=128):
    """x2d: (B, in_width) f32 -> logits (B, num_classes) f32."""
    B, in_w = x2d.shape
    out_pad = params["clf_w"].shape[1]          # num_classes padded to 128
    num_hidden = params["hidden_w"].shape[0]

    # Pick a batch tile: whole (sublane-padded) batch when it is small,
    # otherwise `batch_tile` rows per grid step.
    bt = min(batch_tile, _round_up(B, _SUBLANE))
    B_pad = _round_up(B, bt)
    if B_pad != B:
        x2d = jnp.pad(x2d, ((0, B_pad - B), (0, 0)))
    grid = (B_pad // bt,)

    w1_s = params["fc1_w"].shape
    b1_s = params["fc1_b"].shape
    hw_s = params["hidden_w"].shape
    hb_s = params["hidden_b"].shape
    cw_s = params["clf_w"].shape
    cb_s = params["clf_b"].shape

    out_padded = pl.pallas_call(
        functools.partial(_net_fused_kernel, num_hidden=num_hidden),
        out_shape=jax.ShapeDtypeStruct((B_pad, out_pad), jnp.float32),
        grid_spec=pltpu.PrefetchScalarGridSpec(
            num_scalar_prefetch=0,
            grid=grid,
            in_specs=[
                # Activations: tiled along the batch grid axis.
                pl.BlockSpec((bt, in_w), lambda i: (i, 0)),
                # Weights/biases: constant block index -> resident across grid.
                pl.BlockSpec(w1_s, lambda i: (0, 0)),
                pl.BlockSpec(b1_s, lambda i: (0, 0)),
                pl.BlockSpec(hw_s, lambda i: (0, 0, 0)),
                pl.BlockSpec(hb_s, lambda i: (0, 0, 0)),
                pl.BlockSpec(cw_s, lambda i: (0, 0)),
                pl.BlockSpec(cb_s, lambda i: (0, 0)),
            ],
            out_specs=pl.BlockSpec((bt, out_pad), lambda i: (i, 0)),
        ),
        compiler_params=pltpu.CompilerParams(
            dimension_semantics=("parallel",)),
    )(x2d,
      params["fc1_w"], params["fc1_b"],
      params["hidden_w"], params["hidden_b"],
      params["clf_w"], params["clf_b"])
    return out_padded[:B, :num_classes]


# ----------------------------------------------------------------------------
# Parameter init (deterministic, mirrors __init__ semantics):
#   every Linear weight <- sigma_w * semi-orthogonal, bias ~ N(0, sigma_b).
# Weights stored bf16 (transposed to (in, out)); biases kept f32.
# ----------------------------------------------------------------------------
def _semi_orthogonal(key, out_dim, in_dim, dtype=jnp.float32):
    """Semi-orthogonal matrix of shape (out_dim, in_dim) (stiefel.random analog)."""
    if out_dim >= in_dim:
        a = jax.random.normal(key, (out_dim, in_dim), dtype)
        q, _ = jnp.linalg.qr(a)          # (out, in), orthonormal columns
        return q
    a = jax.random.normal(key, (in_dim, out_dim), dtype)
    q, _ = jnp.linalg.qr(a)              # (in, out)
    return q.T                           # (out, in), orthonormal rows


def init_net_params(key, in_width, width, layers, num_classes,
                    sigma_w=1.0151637852088928,
                    sigma_b=0.0021566949867938977):
    assert layers >= 2, "need at least fc1 + one hidden block"
    keys = jax.random.split(key, 2 * (layers + 1))
    params = {}

    # fc1: block(in_width, width)
    w = sigma_w * _semi_orthogonal(keys[0], width, in_width)      # (out, in)
    b = sigma_b * jax.random.normal(keys[1], (width,))
    params["fc1_w"] = w.T.astype(jnp.bfloat16)                    # (in, out)
    params["fc1_b"] = b.reshape(1, width).astype(jnp.float32)

    # hidden blocks: block(width, width) x (layers - 1)
    hw, hb = [], []
    for i in range(layers - 1):
        wk, bk = keys[2 + 2 * i], keys[3 + 2 * i]
        w = sigma_w * _semi_orthogonal(wk, width, width)
        b = sigma_b * jax.random.normal(bk, (width,))
        hw.append(w.T)                                            # (in, out)
        hb.append(b.reshape(1, width))
    params["hidden_w"] = jnp.stack(hw, 0).astype(jnp.bfloat16)    # (L-1, W, W)
    params["hidden_b"] = jnp.stack(hb, 0).astype(jnp.float32)     # (L-1, 1, W)

    # classifier: nn.Linear(width, num_classes)  (init loop also rewrites it
    # to sigma_w * semi-orthogonal with sigma_b-normal bias, as in the spec).
    wk, bk = keys[2 * layers], keys[2 * layers + 1]
    w = sigma_w * _semi_orthogonal(wk, num_classes, width)        # (out, in)
    b = sigma_b * jax.random.normal(bk, (num_classes,))
    n_pad = _round_up(num_classes, _LANE)
    w_pad = jnp.zeros((width, n_pad), jnp.float32).at[:, :num_classes].set(w.T)
    b_pad = jnp.zeros((1, n_pad), jnp.float32).at[:, :num_classes].set(b)
    params["clf_w"] = w_pad.astype(jnp.bfloat16)                  # (W, n_pad)
    params["clf_b"] = b_pad.astype(jnp.float32)                   # (1, n_pad)
    return params


# ----------------------------------------------------------------------------
# Forward pass (stats_type=None path of Net.forward)
# ----------------------------------------------------------------------------
@functools.partial(jax.jit, static_argnums=(2,))
def net_forward(params, x_nchw, num_classes):
    B = x_nchw.shape[0]
    x = x_nchw.reshape(B, -1).astype(jnp.float32)                 # x.view(B, -1)
    return net_forward_pallas(params, x, num_classes)


# Pure-JAX reference (same dtypes/cast order as the kernel) for a sanity check.
@functools.partial(jax.jit, static_argnums=(2,))
def net_forward_ref(params, x_nchw, num_classes):
    B = x_nchw.shape[0]
    h = x_nchw.reshape(B, -1).astype(jnp.float32)
    h = jnp.tanh(jnp.dot(h.astype(jnp.bfloat16), params["fc1_w"],
                         preferred_element_type=jnp.float32) + params["fc1_b"])
    for l in range(params["hidden_w"].shape[0]):
        h = jnp.tanh(jnp.dot(h.astype(jnp.bfloat16), params["hidden_w"][l],
                             preferred_element_type=jnp.float32)
                     + params["hidden_b"][l])
    out = (jnp.dot(h.astype(jnp.bfloat16), params["clf_w"],
                   preferred_element_type=jnp.float32) + params["clf_b"])
    return out[:, :num_classes]


# ----------------------------------------------------------------------------
# Main
# ----------------------------------------------------------------------------
if __name__ == "__main__":
    # Small synthetic shapes consistent with the module's forward:
    #   flattened image -> width -> ... -> width -> num_classes
    B, C, H, W = 8, 3, 8, 8          # in_width = C*H*W = 192
    width = 128
    layers = 4                        # fc1 + 3 hidden blocks
    num_classes = 10

    key = jax.random.PRNGKey(0)
    pkey, xkey = jax.random.split(key)
    params = init_net_params(pkey, C * H * W, width, layers, num_classes)
    x = jax.random.normal(xkey, (B, C, H, W), dtype=jnp.float32)

    out = net_forward(params, x, num_classes)
    jax.block_until_ready(out)

    assert out.shape == (B, num_classes), out.shape
    assert out.dtype == jnp.float32

    ref = net_forward_ref(params, x, num_classes)
    jax.block_until_ready(ref)
    assert jnp.allclose(out, ref, rtol=2e-2, atol=2e-2), \
        float(jnp.max(jnp.abs(out - ref)))

    print("KERNEL_OK")
</pallas_src>

<mosaic_0001>
module attributes {stable_mosaic.version = 11 : i64} {
  func.func @_net_fused_kernel(%arg0: i32, %arg1: memref<8x192xf32, #tpu.memory_space<vmem>>, %arg2: memref<192x128xbf16, #tpu.memory_space<vmem>>, %arg3: memref<1x128xf32, #tpu.memory_space<vmem>>, %arg4: memref<3x128x128xbf16, #tpu.memory_space<vmem>>, %arg5: memref<3x1x128xf32, #tpu.memory_space<vmem>>, %arg6: memref<128x128xbf16, #tpu.memory_space<vmem>>, %arg7: memref<1x128xf32, #tpu.memory_space<vmem>>, %arg8: memref<8x128xf32, #tpu.memory_space<vmem>>) attributes {dimension_semantics = [#tpu.dimension_semantics<parallel>], iteration_bounds = array<i64: 1>, scalar_prefetch = 0 : i64, scratch_operands = 0 : i64, tpu.core_type = #tpu.core_type<tc>, window_params = [{transform_indices = @transform_0, window_bounds = array<i64: 8, 192>}, {pipeline_mode = #tpu.pipeline_mode<synchronous>, transform_indices = @transform_1, window_bounds = array<i64: 192, 128>}, {pipeline_mode = #tpu.pipeline_mode<synchronous>, transform_indices = @transform_2, window_bounds = array<i64: 1, 128>}, {pipeline_mode = #tpu.pipeline_mode<synchronous>, transform_indices = @transform_3, window_bounds = array<i64: 3, 128, 128>}, {pipeline_mode = #tpu.pipeline_mode<synchronous>, transform_indices = @transform_4, window_bounds = array<i64: 3, 1, 128>}, {pipeline_mode = #tpu.pipeline_mode<synchronous>, transform_indices = @transform_5, window_bounds = array<i64: 128, 128>}, {pipeline_mode = #tpu.pipeline_mode<synchronous>, transform_indices = @transform_6, window_bounds = array<i64: 1, 128>}, {transform_indices = @transform_7, window_bounds = array<i64: 8, 128>}]} {
    %c0 = arith.constant 0 : index
    %c0_0 = arith.constant 0 : index
    %0 = vector.load %arg1[%c0, %c0_0] : memref<8x192xf32, #tpu.memory_space<vmem>>, vector<8x192xf32>
    %1 = arith.truncf %0 : vector<8x192xf32> to vector<8x192xbf16>
    %c0_1 = arith.constant 0 : index
    %c0_2 = arith.constant 0 : index
    %2 = vector.load %arg2[%c0_1, %c0_2] : memref<192x128xbf16, #tpu.memory_space<vmem>>, vector<192x128xbf16>
    %cst = arith.constant dense<0.000000e+00> : vector<8x128xf32>
    %3 = tpu.matmul %1, %2, %cst {dimension_numbers = #tpu.dot_dimension_numbers<[1], [0], [0], [1], [0, 0, 1, 1], [], []>} : vector<8x192xbf16>, vector<192x128xbf16>, vector<8x128xf32> -> vector<8x128xf32>
    %c0_3 = arith.constant 0 : index
    %c0_4 = arith.constant 0 : index
    %4 = vector.load %arg3[%c0_3, %c0_4] : memref<1x128xf32, #tpu.memory_space<vmem>>, vector<1x128xf32>
    %5 = vector.broadcast %4 : vector<1x128xf32> to vector<8x128xf32>
    %6 = arith.addf %3, %5 : vector<8x128xf32>
    %7 = math.tanh %6 : vector<8x128xf32>
    %c0_i32 = arith.constant 0 : i32
    %8 = arith.truncf %7 : vector<8x128xf32> to vector<8x128xbf16>
    %9 = arith.index_cast %c0_i32 : i32 to index
    %c0_5 = arith.constant 0 : index
    %c0_6 = arith.constant 0 : index
    %10 = vector.load %arg4[%9, %c0_5, %c0_6] : memref<3x128x128xbf16, #tpu.memory_space<vmem>>, vector<1x128x128xbf16>
    %11 = vector.shape_cast %10 : vector<1x128x128xbf16> to vector<128x128xbf16>
    %cst_7 = arith.constant dense<0.000000e+00> : vector<8x128xf32>
    %12 = tpu.matmul %8, %11, %cst_7 {dimension_numbers = #tpu.dot_dimension_numbers<[1], [0], [0], [1], [0, 0, 1, 1], [], []>} : vector<8x128xbf16>, vector<128x128xbf16>, vector<8x128xf32> -> vector<8x128xf32>
    %13 = arith.index_cast %c0_i32 : i32 to index
    %c0_8 = arith.constant 0 : index
    %c0_9 = arith.constant 0 : index
    %14 = vector.load %arg5[%13, %c0_8, %c0_9] : memref<3x1x128xf32, #tpu.memory_space<vmem>>, vector<1x1x128xf32>
    %15 = vector.shape_cast %14 : vector<1x1x128xf32> to vector<1x128xf32>
    %16 = vector.broadcast %15 : vector<1x128xf32> to vector<8x128xf32>
    %17 = arith.addf %12, %16 : vector<8x128xf32>
    %18 = math.tanh %17 : vector<8x128xf32>
    %c1_i32 = arith.constant 1 : i32
    %19 = arith.truncf %18 : vector<8x128xf32> to vector<8x128xbf16>
    %20 = arith.index_cast %c1_i32 : i32 to index
    %c0_10 = arith.constant 0 : index
    %c0_11 = arith.constant 0 : index
    %21 = vector.load %arg4[%20, %c0_10, %c0_11] : memref<3x128x128xbf16, #tpu.memory_space<vmem>>, vector<1x128x128xbf16>
    %22 = vector.shape_cast %21 : vector<1x128x128xbf16> to vector<128x128xbf16>
    %cst_12 = arith.constant dense<0.000000e+00> : vector<8x128xf32>
    %23 = tpu.matmul %19, %22, %cst_12 {dimension_numbers = #tpu.dot_dimension_numbers<[1], [0], [0], [1], [0, 0, 1, 1], [], []>} : vector<8x128xbf16>, vector<128x128xbf16>, vector<8x128xf32> -> vector<8x128xf32>
    %24 = arith.index_cast %c1_i32 : i32 to index
    %c0_13 = arith.constant 0 : index
    %c0_14 = arith.constant 0 : index
    %25 = vector.load %arg5[%24, %c0_13, %c0_14] : memref<3x1x128xf32, #tpu.memory_space<vmem>>, vector<1x1x128xf32>
    %26 = vector.shape_cast %25 : vector<1x1x128xf32> to vector<1x128xf32>
    %27 = vector.broadcast %26 : vector<1x128xf32> to vector<8x128xf32>
    %28 = arith.addf %23, %27 : vector<8x128xf32>
    %29 = math.tanh %28 : vector<8x128xf32>
    %c2_i32 = arith.constant 2 : i32
    %30 = arith.truncf %29 : vector<8x128xf32> to vector<8x128xbf16>
    %31 = arith.index_cast %c2_i32 : i32 to index
    %c0_15 = arith.constant 0 : index
    %c0_16 = arith.constant 0 : index
    %32 = vector.load %arg4[%31, %c0_15, %c0_16] : memref<3x128x128xbf16, #tpu.memory_space<vmem>>, vector<1x128x128xbf16>
    %33 = vector.shape_cast %32 : vector<1x128x128xbf16> to vector<128x128xbf16>
    %cst_17 = arith.constant dense<0.000000e+00> : vector<8x128xf32>
    %34 = tpu.matmul %30, %33, %cst_17 {dimension_numbers = #tpu.dot_dimension_numbers<[1], [0], [0], [1], [0, 0, 1, 1], [], []>} : vector<8x128xbf16>, vector<128x128xbf16>, vector<8x128xf32> -> vector<8x128xf32>
    %35 = arith.index_cast %c2_i32 : i32 to index
    %c0_18 = arith.constant 0 : index
    %c0_19 = arith.constant 0 : index
    %36 = vector.load %arg5[%35, %c0_18, %c0_19] : memref<3x1x128xf32, #tpu.memory_space<vmem>>, vector<1x1x128xf32>
    %37 = vector.shape_cast %36 : vector<1x1x128xf32> to vector<1x128xf32>
    %38 = vector.broadcast %37 : vector<1x128xf32> to vector<8x128xf32>
    %39 = arith.addf %34, %38 : vector<8x128xf32>
    %40 = math.tanh %39 : vector<8x128xf32>
    %c3_i32 = arith.constant 3 : i32
    %41 = arith.truncf %40 : vector<8x128xf32> to vector<8x128xbf16>
    %c0_20 = arith.constant 0 : index
    %c0_21 = arith.constant 0 : index
    %42 = vector.load %arg6[%c0_20, %c0_21] : memref<128x128xbf16, #tpu.memory_space<vmem>>, vector<128x128xbf16>
    %cst_22 = arith.constant dense<0.000000e+00> : vector<8x128xf32>
    %43 = tpu.matmul %41, %42, %cst_22 {dimension_numbers = #tpu.dot_dimension_numbers<[1], [0], [0], [1], [0, 0, 1, 1], [], []>} : vector<8x128xbf16>, vector<128x128xbf16>, vector<8x128xf32> -> vector<8x128xf32>
    %c0_23 = arith.constant 0 : index
    %c0_24 = arith.constant 0 : index
    %44 = vector.load %arg7[%c0_23, %c0_24] : memref<1x128xf32, #tpu.memory_space<vmem>>, vector<1x128xf32>
    %45 = vector.broadcast %44 : vector<1x128xf32> to vector<8x128xf32>
    %46 = arith.addf %43, %45 : vector<8x128xf32>
    %c0_25 = arith.constant 0 : index
    %c0_26 = arith.constant 0 : index
    %47 = vector.load %arg8[%c0_25, %c0_26] : memref<8x128xf32, #tpu.memory_space<vmem>>, vector<8x128xf32>
    tpu.vector_store %arg8[%c0_25, %c0_26], %46 {strides = array<i32>} : memref<8x128xf32, #tpu.memory_space<vmem>>, vector<8x128xf32>,
    return
  }
  func.func @transform_0(%arg0: i32) -> (i32, i32) {
    %c0_i32 = arith.constant 0 : i32
    %c0_i32_0 = arith.constant 0 : i32
    return %arg0, %c0_i32 : i32, i32
  }
  func.func @transform_1(%arg0: i32) -> (i32, i32) {
    %c0_i32 = arith.constant 0 : i32
    %c0_i32_0 = arith.constant 0 : i32
    %c0_i32_1 = arith.constant 0 : i32
    return %c0_i32, %c0_i32_0 : i32, i32
  }
  func.func @transform_2(%arg0: i32) -> (i32, i32) {
    %c0_i32 = arith.constant 0 : i32
    %c0_i32_0 = arith.constant 0 : i32
    %c0_i32_1 = arith.constant 0 : i32
    return %c0_i32, %c0_i32_0 : i32, i32
  }
  func.func @transform_3(%arg0: i32) -> (i32, i32, i32) {
    %c0_i32 = arith.constant 0 : i32
    %c0_i32_0 = arith.constant 0 : i32
    %c0_i32_1 = arith.constant 0 : i32
    %c0_i32_2 = arith.constant 0 : i32
    return %c0_i32, %c0_i32_0, %c0_i32_1 : i32, i32, i32
  }
  func.func @transform_4(%arg0: i32) -> (i32, i32, i32) {
    %c0_i32 = arith.constant 0 : i32
    %c0_i32_0 = arith.constant 0 : i32
    %c0_i32_1 = arith.constant 0 : i32
    %c0_i32_2 = arith.constant 0 : i32
    return %c0_i32, %c0_i32_0, %c0_i32_1 : i32, i32, i32
  }
  func.func @transform_5(%arg0: i32) -> (i32, i32) {
    %c0_i32 = arith.constant 0 : i32
    %c0_i32_0 = arith.constant 0 : i32
    %c0_i32_1 = arith.constant 0 : i32
    return %c0_i32, %c0_i32_0 : i32, i32
  }
  func.func @transform_6(%arg0: i32) -> (i32, i32) {
    %c0_i32 = arith.constant 0 : i32
    %c0_i32_0 = arith.constant 0 : i32
    %c0_i32_1 = arith.constant 0 : i32
    return %c0_i32, %c0_i32_0 : i32, i32
  }
  func.func @transform_7(%arg0: i32) -> (i32, i32) {
    %c0_i32 = arith.constant 0 : i32
    %c0_i32_0 = arith.constant 0 : i32
    return %arg0, %c0_i32 : i32, i32
  }
}

</mosaic_0001>

<llo_original>
// kernel: net_forward.1
$region0: #{net_forward.1}
  #allocation0 [shape = 'u32[]', space=smem, size = 0x4, offset = 0x4, fixed_abs, tag = 'smem constant byte address 0x4 - core index']
  #allocation1 [shape = 'u32[144,128]{1,0:T(1,128)}', space=vmem, size = 0x12000, scoped, tag = 'internal scratch']
  %s0 = inlined_call_operand.vmem [shape: f32[8,192], index: 0, kind: input, shape index: {}]
  %s1 = inlined_call_operand.hbm [shape: bf16[192,128], index: 1, kind: input, shape index: {}]
  %s2 = inlined_call_operand.vmem [shape: f32[1,128], index: 2, kind: input, shape index: {}]
  %s3 = inlined_call_operand.vmem [shape: bf16[3,128,128], index: 3, kind: input, shape index: {}]
  %s4 = inlined_call_operand.vmem [shape: f32[3,1,128], index: 4, kind: input, shape index: {}]
  %s5 = inlined_call_operand.hbm [shape: bf16[128,128], index: 5, kind: input, shape index: {}]
  %s6 = inlined_call_operand.vmem [shape: f32[1,128], index: 6, kind: input, shape index: {}]
  %s7 = inlined_call_operand.hbm [shape: f32[8,128], index: 7, kind: output, shape index: {}]
  %s8 = sld [smem:[#allocation0]]
  $region46: #{net_forward.1} parent=0
    _
  %s10 = ssub.s32 1, %s8
  %s11 = scalar_select 0, %s10, %s8
  $region1: #{net_forward.1} parent=0
    #allocation2 [shape = 'u8[49152]{0}', space=vmem, size = 0xc000, scoped, tag = 'input window, operand 1, single buffered']
    #allocation3 [shape = 's32[1]{0}', space=sflag, size = 0x4, scoped, tag = 'scoped memory for net_forward.1']
    #allocation4 [shape = 's32[1]{0}', space=sflag, size = 0x4, scoped, tag = 'scoped memory for net_forward.1']
    #allocation5 [shape = 'u8[32768]{0}', space=vmem, size = 0x8000, scoped, tag = 'input window, operand 5, single buffered']
    #allocation6 [shape = 's32[1]{0}', space=sflag, size = 0x4, scoped, tag = 'scoped memory for net_forward.1']
    #allocation7 [shape = 'u8[4096]{0}', space=vmem, size = 0x1000, scoped, tag = 'output window, operand 0, single buffered']
    %12 = vsyncpa [#allocation3], 0
    %13 = vsyncpa [#allocation6], 0
    %14 = vsyncpa [#allocation4], 0
    // Predicated region
    $region2: #{net_forward.1} parent=1 // pred_check
      _
    $region3: #{net_forward.1} parent=1 // pred_check_branch
      %16 = sbr.rel (0) target = $region5
    $region4: #{net_forward.1} parent=1 // pred_region
      _
    $region5: #{net_forward.1} parent=1 // pred_fallthru
      _
    // Predicated region
    $region6: #{net_forward.1} parent=1 // pred_check
      _
    $region7: #{net_forward.1} parent=1 // pred_check_branch
      %18 = sbr.rel (0) target = $region9
    $region8: #{net_forward.1} parent=1 // pred_region
      %s20 = ssub.s32 1536, 1536
      %21 = vsyncadd [#allocation3], %s20
      %s22 = sshll.u32 [#allocation2], 4
      %s23 = int_to_ptr.vmem [resolvable:$true] %s22
      %28 = dma.hbm_to_vmem [thread:$0]  %s1, 1536, %s23, [#allocation3], 64, 64, 4
    $region9: #{net_forward.1} parent=1 // pred_fallthru
      _
    // Predicated region
    $region10: #{net_forward.1} parent=1 // pred_check
      _
    $region11: #{net_forward.1} parent=1 // pred_check_branch
      %30 = sbr.rel (0) target = $region13
    $region12: #{net_forward.1} parent=1 // pred_region
      _
    $region13: #{net_forward.1} parent=1 // pred_fallthru
      _
    // Predicated region
    $region14: #{net_forward.1} parent=1 // pred_check
      _
    $region15: #{net_forward.1} parent=1 // pred_check_branch
      %32 = sbr.rel (0) target = $region17
    $region16: #{net_forward.1} parent=1 // pred_region
      _
    $region17: #{net_forward.1} parent=1 // pred_fallthru
      _
    // Predicated region
    $region18: #{net_forward.1} parent=1 // pred_check
      _
    $region19: #{net_forward.1} parent=1 // pred_check_branch
      %34 = sbr.rel (0) target = $region21
    $region20: #{net_forward.1} parent=1 // pred_region
      _
    $region21: #{net_forward.1} parent=1 // pred_fallthru
      _
    // Predicated region
    $region22: #{net_forward.1} parent=1 // pred_check
      _
    $region23: #{net_forward.1} parent=1 // pred_check_branch
      %36 = sbr.rel (0) target = $region25
    $region24: #{net_forward.1} parent=1 // pred_region
      %s38 = ssub.s32 1024, 1024
      %39 = vsyncadd [#allocation6], %s38
      %s40 = sshll.u32 [#allocation5], 4
      %s41 = int_to_ptr.vmem [resolvable:$true] %s40
      %46 = dma.hbm_to_vmem [thread:$0]  %s5, 1024, %s41, [#allocation6], 64, 64, 4
    $region25: #{net_forward.1} parent=1 // pred_fallthru
      _
    // Predicated region
    $region26: #{net_forward.1} parent=1 // pred_check
      _
    $region27: #{net_forward.1} parent=1 // pred_check_branch
      %48 = sbr.rel (0) target = $region29
    $region28: #{net_forward.1} parent=1 // pred_region
      _
    $region29: #{net_forward.1} parent=1 // pred_fallthru
      _
    // Predicated region
    $region30: #{net_forward.1} parent=1 // pred_check
      _
    $region31: #{net_forward.1} parent=1 // pred_check_branch
      %50 = sbr.rel (0) target = $region33
    $region32: #{net_forward.1} parent=1 // pred_region
      %51 = dma.done [#allocation3], 1536
    $region33: #{net_forward.1} parent=1 // pred_fallthru
      _
    // Predicated region
    $region34: #{net_forward.1} parent=1 // pred_check
      _
    $region35: #{net_forward.1} parent=1 // pred_check_branch
      %53 = sbr.rel (0) target = $region37
    $region36: #{net_forward.1} parent=1 // pred_region
      %54 = dma.done [#allocation6], 1024
    $region37: #{net_forward.1} parent=1 // pred_fallthru
      _
    %v56 = vld [vmem:[%s0] sm:$0xff]
    %v57 = vld [vmem:[%s0 + $0x8] sm:$0xff]
    %v58 = vpack.c.bf16 %v56, %v56
    %v59 = vpack.c.bf16 %v57, %v57
    %v60 = vld [vmem:[#allocation2] sm:$0xf]
    %v61 = vld [vmem:[#allocation2 + $0x4] sm:$0xf]
    %v62 = vld [vmem:[#allocation2 + $0x8] sm:$0xf]
    %v63 = vld [vmem:[#allocation2 + $0xc] sm:$0xf]
    %v64 = vld [vmem:[#allocation2 + $0x10] sm:$0xf]
    %v65 = vld [vmem:[#allocation2 + $0x14] sm:$0xf]
    %v66 = vld [vmem:[#allocation2 + $0x18] sm:$0xf]
    %v67 = vld [vmem:[#allocation2 + $0x1c] sm:$0xf]
    %v68 = vld [vmem:[#allocation2 + $0x20] sm:$0xf]
    %v69 = vld [vmem:[#allocation2 + $0x24] sm:$0xf]
    %v70 = vld [vmem:[#allocation2 + $0x28] sm:$0xf]
    %v71 = vld [vmem:[#allocation2 + $0x2c] sm:$0xf]
    %v72 = vld [vmem:[#allocation2 + $0x30] sm:$0xf]
    %v73 = vld [vmem:[#allocation2 + $0x34] sm:$0xf]
    %v74 = vld [vmem:[#allocation2 + $0x38] sm:$0xf]
    %v75 = vld [vmem:[#allocation2 + $0x3c] sm:$0xf]
    %v76 = vld [vmem:[#allocation2 + $0x40] sm:$0xf]
    %v77 = vld [vmem:[#allocation2 + $0x44] sm:$0xf]
    %v78 = vld [vmem:[#allocation2 + $0x48] sm:$0xf]
    %v79 = vld [vmem:[#allocation2 + $0x4c] sm:$0xf]
    %v80 = vld [vmem:[#allocation2 + $0x50] sm:$0xf]
    %v81 = vld [vmem:[#allocation2 + $0x54] sm:$0xf]
    %v82 = vld [vmem:[#allocation2 + $0x58] sm:$0xf]
    %v83 = vld [vmem:[#allocation2 + $0x5c] sm:$0xf]
    %v84 = vld [vmem:[%s2] sm:$0x1]
    %v86 = vlaneseq
    %v87 = vshrl.u32 %v86, 7
    %v88 = vsub.s32 0, %v87
    %v89 = vrot.slane %v84, %v88
    %v115 = vunpack.c.l.b16 %v60
    %v116 = vunpack.c.l.b16 %v61
    %v117 = vunpack.c.l.b16 %v62
    %v118 = vunpack.c.l.b16 %v63
    %v119 = vunpack.c.l.b16 %v64
    %v120 = vunpack.c.l.b16 %v65
    %v121 = vunpack.c.l.b16 %v66
    %v122 = vunpack.c.l.b16 %v67
    %v123 = vunpack.c.l.b16 %v68
    %v124 = vunpack.c.l.b16 %v69
    %v125 = vunpack.c.l.b16 %v70
    %v126 = vunpack.c.l.b16 %v71
    %v127 = vunpack.c.l.b16 %v72
    %v128 = vunpack.c.l.b16 %v73
    %v129 = vunpack.c.l.b16 %v74
    %v130 = vunpack.c.l.b16 %v75
    %v131 = vunpack.c.l.b16 %v76
    %v132 = vunpack.c.l.b16 %v77
    %v133 = vunpack.c.l.b16 %v78
    %v134 = vunpack.c.l.b16 %v79
    %v135 = vunpack.c.l.b16 %v80
    %v136 = vunpack.c.l.b16 %v81
    %v137 = vunpack.c.l.b16 %v82
    %v138 = vunpack.c.l.b16 %v83
    %v139 = vpack.c.b16 %v116, %v115
    %v140 = vpack.c.b16 %v118, %v117
    %v141 = vpack.c.b16 %v120, %v119
    %v142 = vpack.c.b16 %v122, %v121
    %v143 = vpack.c.b16 %v124, %v123
    %v144 = vpack.c.b16 %v126, %v125
    %v145 = vpack.c.b16 %v128, %v127
    %v146 = vpack.c.b16 %v130, %v129
    %v147 = vpack.c.b16 %v132, %v131
    %v148 = vpack.c.b16 %v134, %v133
    %v149 = vpack.c.b16 %v136, %v135
    %v150 = vpack.c.b16 %v138, %v137
    %vm163 = vcmask 523264
    %v165 = vsel %vm163, %v59, 0
    %167 = vmatprep.subr.bf16.mxu0 0
    %168 = vmatpush1.bf16.msra.mxu0 %v139
    %169 = vmatprep.subr.bf16.mxu0 0
    %170 = vmatpush1.bf16.msra.mxu0 %v140
    %171 = vmatprep.subr.bf16.mxu0 0
    %172 = vmatpush1.bf16.msra.mxu0 %v141
    %173 = vmatprep.subr.bf16.mxu0 0
    %174 = vmatpush1.bf16.msra.mxu0 %v142
    %175 = vmatprep.subr.bf16.mxu0 0
    %176 = vmatpush1.bf16.msra.mxu0 %v143
    %177 = vmatprep.subr.bf16.mxu0 0
    %178 = vmatpush1.bf16.msra.mxu0 %v144
    %179 = vmatprep.subr.bf16.mxu0 0
    %180 = vmatpush1.bf16.msra.mxu0 %v145
    %181 = vmatprep.subr.bf16.mxu0 0
    %182 = vmatpush1.bf16.msra.mxu0 %v146
    %183 = vmatprep.subr.bf16.mxu0 0
    %184 = vmatpush1.bf16.msra.mxu0 %v147
    %185 = vmatprep.subr.bf16.mxu0 0
    %186 = vmatpush1.bf16.msra.mxu0 %v148
    %187 = vmatprep.subr.bf16.mxu0 0
    %188 = vmatpush1.bf16.msra.mxu0 %v149
    %189 = vmatprep.subr.bf16.mxu0 0
    %190 = vmatpush1.bf16.msra.mxu0 %v150
    %191 = vmatprep.subr.bf16.mxu0 0
    %192 = vmatpush1.bf16.msra.mxu0 0
    %193 = vmatprep.subr.bf16.mxu0 0
    %194 = vmatpush1.bf16.msra.mxu0 0
    %195 = vmatprep.subr.bf16.mxu0 0
    %196 = vmatpush1.bf16.msra.mxu0 0
    %197 = vmatprep.subr.bf16.mxu0 0
    %198 = vmatpush1.bf16.msra.mxu0 0
    %199 = vmatprep.mubr.bf16.mxu0 %v165
    %200 = vmatmul.mubr.bf16.gmra.mrb[0].mxu0 %v58
    %v201 = vpop.f32.mrb[0].mxu0
    %v202 = vadd.f32 %v89, %v201
    %v203 = vpop.f32.mrb[0].mxu0
    %v204 = vpop.f32.mrb[0].mxu0
    %v205 = vpop.f32.mrb[0].mxu0
    %206 = vdwg.mxu0
    %v207 = vtanh.pop %v202
    %v208 = vpack.c.bf16 %v207, %v207
    %v209 = vld [vmem:[%s3] sm:$0xf]
    %v210 = vld [vmem:[%s3 + $0x4] sm:$0xf]
    %v211 = vld [vmem:[%s3 + $0x8] sm:$0xf]
    %v212 = vld [vmem:[%s3 + $0xc] sm:$0xf]
    %v213 = vld [vmem:[%s3 + $0x10] sm:$0xf]
    %v214 = vld [vmem:[%s3 + $0x14] sm:$0xf]
    %v215 = vld [vmem:[%s3 + $0x18] sm:$0xf]
    %v216 = vld [vmem:[%s3 + $0x1c] sm:$0xf]
    %v217 = vld [vmem:[%s3 + $0x20] sm:$0xf]
    %v218 = vld [vmem:[%s3 + $0x24] sm:$0xf]
    %v219 = vld [vmem:[%s3 + $0x28] sm:$0xf]
    %v220 = vld [vmem:[%s3 + $0x2c] sm:$0xf]
    %v221 = vld [vmem:[%s3 + $0x30] sm:$0xf]
    %v222 = vld [vmem:[%s3 + $0x34] sm:$0xf]
    %v223 = vld [vmem:[%s3 + $0x38] sm:$0xf]
    %v224 = vld [vmem:[%s3 + $0x3c] sm:$0xf]
    %v225 = vld [vmem:[%s4] sm:$0x1]
    %v227 = vlaneseq
    %v228 = vshrl.u32 %v227, 7
    %v229 = vsub.s32 0, %v228
    %v230 = vrot.slane %v225, %v229
    %v248 = vunpack.c.l.b16 %v209
    %v249 = vunpack.c.l.b16 %v210
    %v250 = vunpack.c.l.b16 %v211
    %v251 = vunpack.c.l.b16 %v212
    %v252 = vunpack.c.l.b16 %v213
    %v253 = vunpack.c.l.b16 %v214
    %v254 = vunpack.c.l.b16 %v215
    %v255 = vunpack.c.l.b16 %v216
    %v256 = vunpack.c.l.b16 %v217
    %v257 = vunpack.c.l.b16 %v218
    %v258 = vunpack.c.l.b16 %v219
    %v259 = vunpack.c.l.b16 %v220
    %v260 = vunpack.c.l.b16 %v221
    %v261 = vunpack.c.l.b16 %v222
    %v262 = vunpack.c.l.b16 %v223
    %v263 = vunpack.c.l.b16 %v224
    %v264 = vpack.c.b16 %v249, %v248
    %v265 = vpack.c.b16 %v251, %v250
    %v266 = vpack.c.b16 %v253, %v252
    %v267 = vpack.c.b16 %v255, %v254
    %v268 = vpack.c.b16 %v257, %v256
    %v269 = vpack.c.b16 %v259, %v258
    %v270 = vpack.c.b16 %v261, %v260
    %v271 = vpack.c.b16 %v263, %v262
    %280 = vmatprep.subr.bf16.mxu0 0
    %281 = vmatpush1.bf16.msra.mxu0 %v264
    %282 = vmatprep.subr.bf16.mxu0 0
    %283 = vmatpush1.bf16.msra.mxu0 %v265
    %284 = vmatprep.subr.bf16.mxu0 0
    %285 = vmatpush1.bf16.msra.mxu0 %v266
    %286 = vmatprep.subr.bf16.mxu0 0
    %287 = vmatpush1.bf16.msra.mxu0 %v267
    %288 = vmatprep.subr.bf16.mxu0 0
    %289 = vmatpush1.bf16.msra.mxu0 %v268
    %290 = vmatprep.subr.bf16.mxu0 0
    %291 = vmatpush1.bf16.msra.mxu0 %v269
    %292 = vmatprep.subr.bf16.mxu0 0
    %293 = vmatpush1.bf16.msra.mxu0 %v270
    %294 = vmatprep.subr.bf16.mxu0 0
    %295 = vmatpush1.bf16.msra.mxu0 %v271
    %296 = vmatprep.subr.bf16.mxu0 0
    %297 = vmatpush1.bf16.msra.mxu0 0
    %298 = vmatprep.subr.bf16.mxu0 0
    %299 = vmatpush1.bf16.msra.mxu0 0
    %300 = vmatprep.subr.bf16.mxu0 0
    %301 = vmatpush1.bf16.msra.mxu0 0
    %302 = vmatprep.subr.bf16.mxu0 0
    %303 = vmatpush1.bf16.msra.mxu0 0
    %304 = vmatprep.subr.bf16.mxu0 0
    %305 = vmatpush1.bf16.msra.mxu0 0
    %306 = vmatprep.subr.bf16.mxu0 0
    %307 = vmatpush1.bf16.msra.mxu0 0
    %308 = vmatprep.subr.bf16.mxu0 0
    %309 = vmatpush1.bf16.msra.mxu0 0
    %310 = vmatprep.subr.bf16.mxu0 0
    %311 = vmatpush1.bf16.msra.mxu0 0
    %312 = vmatprep.mubr.bf16.mxu0 0
    %313 = vmatmul.mubr.bf16.gmra.mrb[0].mxu0 %v208
    %v314 = vpop.f32.mrb[0].mxu0
    %v315 = vadd.f32 %v230, %v314
    %v316 = vpop.f32.mrb[0].mxu0
    %v317 = vpop.f32.mrb[0].mxu0
    %v318 = vpop.f32.mrb[0].mxu0
    %319 = vdwg.mxu0
    %v320 = vtanh.pop %v315
    %v321 = vpack.c.bf16 %v320, %v320
    %s322 = scalar_lea.vmem %s3, 64
    %v323 = vld [vmem:[%s322] sm:$0xf]
    %v324 = vld [vmem:[%s322 + $0x4] sm:$0xf]
    %v325 = vld [vmem:[%s322 + $0x8] sm:$0xf]
    %v326 = vld [vmem:[%s322 + $0xc] sm:$0xf]
    %v327 = vld [vmem:[%s322 + $0x10] sm:$0xf]
    %v328 = vld [vmem:[%s322 + $0x14] sm:$0xf]
    %v329 = vld [vmem:[%s322 + $0x18] sm:$0xf]
    %v330 = vld [vmem:[%s322 + $0x1c] sm:$0xf]
    %v331 = vld [vmem:[%s322 + $0x20] sm:$0xf]
    %v332 = vld [vmem:[%s322 + $0x24] sm:$0xf]
    %v333 = vld [vmem:[%s322 + $0x28] sm:$0xf]
    %v334 = vld [vmem:[%s322 + $0x2c] sm:$0xf]
    %v335 = vld [vmem:[%s322 + $0x30] sm:$0xf]
    %v336 = vld [vmem:[%s322 + $0x34] sm:$0xf]
    %v337 = vld [vmem:[%s322 + $0x38] sm:$0xf]
    %v338 = vld [vmem:[%s322 + $0x3c] sm:$0xf]
    %s339 = scalar_lea.vmem %s4, 1
    %v340 = vld [vmem:[%s339] sm:$0x1]
    %v342 = vlaneseq
    %v343 = vshrl.u32 %v342, 7
    %v344 = vsub.s32 0, %v343
    %v345 = vrot.slane %v340, %v344
    %v363 = vunpack.c.l.b16 %v323
    %v364 = vunpack.c.l.b16 %v324
    %v365 = vunpack.c.l.b16 %v325
    %v366 = vunpack.c.l.b16 %v326
    %v367 = vunpack.c.l.b16 %v327
    %v368 = vunpack.c.l.b16 %v328
    %v369 = vunpack.c.l.b16 %v329
    %v370 = vunpack.c.l.b16 %v330
    %v371 = vunpack.c.l.b16 %v331
    %v372 = vunpack.c.l.b16 %v332
    %v373 = vunpack.c.l.b16 %v333
    %v374 = vunpack.c.l.b16 %v334
    %v375 = vunpack.c.l.b16 %v335
    %v376 = vunpack.c.l.b16 %v336
    %v377 = vunpack.c.l.b16 %v337
    %v378 = vunpack.c.l.b16 %v338
    %v379 = vpack.c.b16 %v364, %v363
    %v380 = vpack.c.b16 %v366, %v365
    %v381 = vpack.c.b16 %v368, %v367
    %v382 = vpack.c.b16 %v370, %v369
    %v383 = vpack.c.b16 %v372, %v371
    %v384 = vpack.c.b16 %v374, %v373
    %v385 = vpack.c.b16 %v376, %v375
    %v386 = vpack.c.b16 %v378, %v377
    %395 = vmatprep.subr.bf16.mxu0 0
    %396 = vmatpush1.bf16.msra.mxu0 %v379
    %397 = vmatprep.subr.bf16.mxu0 0
    %398 = vmatpush1.bf16.msra.mxu0 %v380
    %399 = vmatprep.subr.bf16.mxu0 0
    %400 = vmatpush1.bf16.msra.mxu0 %v381
    %401 = vmatprep.subr.bf16.mxu0 0
    %402 = vmatpush1.bf16.msra.mxu0 %v382
    %403 = vmatprep.subr.bf16.mxu0 0
    %404 = vmatpush1.bf16.msra.mxu0 %v383
    %405 = vmatprep.subr.bf16.mxu0 0
    %406 = vmatpush1.bf16.msra.mxu0 %v384
    %407 = vmatprep.subr.bf16.mxu0 0
    %408 = vmatpush1.bf16.msra.mxu0 %v385
    %409 = vmatprep.subr.bf16.mxu0 0
    %410 = vmatpush1.bf16.msra.mxu0 %v386
    %411 = vmatprep.subr.bf16.mxu0 0
    %412 = vmatpush1.bf16.msra.mxu0 0
    %413 = vmatprep.subr.bf16.mxu0 0
    %414 = vmatpush1.bf16.msra.mxu0 0
    %415 = vmatprep.subr.bf16.mxu0 0
    %416 = vmatpush1.bf16.msra.mxu0 0
    %417 = vmatprep.subr.bf16.mxu0 0
    %418 = vmatpush1.bf16.msra.mxu0 0
    %419 = vmatprep.subr.bf16.mxu0 0
    %420 = vmatpush1.bf16.msra.mxu0 0
    %421 = vmatprep.subr.bf16.mxu0 0
    %422 = vmatpush1.bf16.msra.mxu0 0
    %423 = vmatprep.subr.bf16.mxu0 0
    %424 = vmatpush1.bf16.msra.mxu0 0
    %425 = vmatprep.subr.bf16.mxu0 0
    %426 = vmatpush1.bf16.msra.mxu0 0
    %427 = vmatprep.mubr.bf16.mxu0 0
    %428 = vmatmul.mubr.bf16.gmra.mrb[0].mxu0 %v321
    %v429 = vpop.f32.mrb[0].mxu0
    %v430 = vadd.f32 %v345, %v429
    %v431 = vpop.f32.mrb[0].mxu0
    %v432 = vpop.f32.mrb[0].mxu0
    %v433 = vpop.f32.mrb[0].mxu0
    %434 = vdwg.mxu0
    %v435 = vtanh.pop %v430
    %v436 = vpack.c.bf16 %v435, %v435
    %s437 = scalar_lea.vmem %s3, 128
    %v438 = vld [vmem:[%s437] sm:$0xf]
    %v439 = vld [vmem:[%s437 + $0x4] sm:$0xf]
    %v440 = vld [vmem:[%s437 + $0x8] sm:$0xf]
    %v441 = vld [vmem:[%s437 + $0xc] sm:$0xf]
    %v442 = vld [vmem:[%s437 + $0x10] sm:$0xf]
    %v443 = vld [vmem:[%s437 + $0x14] sm:$0xf]
    %v444 = vld [vmem:[%s437 + $0x18] sm:$0xf]
    %v445 = vld [vmem:[%s437 + $0x1c] sm:$0xf]
    %v446 = vld [vmem:[%s437 + $0x20] sm:$0xf]
    %v447 = vld [vmem:[%s437 + $0x24] sm:$0xf]
    %v448 = vld [vmem:[%s437 + $0x28] sm:$0xf]
    %v449 = vld [vmem:[%s437 + $0x2c] sm:$0xf]
    %v450 = vld [vmem:[%s437 + $0x30] sm:$0xf]
    %v451 = vld [vmem:[%s437 + $0x34] sm:$0xf]
    %v452 = vld [vmem:[%s437 + $0x38] sm:$0xf]
    %v453 = vld [vmem:[%s437 + $0x3c] sm:$0xf]
    %s454 = scalar_lea.vmem %s4, 2
    %v455 = vld [vmem:[%s454] sm:$0x1]
    %v457 = vlaneseq
    %v458 = vshrl.u32 %v457, 7
    %v459 = vsub.s32 0, %v458
    %v460 = vrot.slane %v455, %v459
    %v478 = vunpack.c.l.b16 %v438
    %v479 = vunpack.c.l.b16 %v439
    %v480 = vunpack.c.l.b16 %v440
    %v481 = vunpack.c.l.b16 %v441
    %v482 = vunpack.c.l.b16 %v442
    %v483 = vunpack.c.l.b16 %v443
    %v484 = vunpack.c.l.b16 %v444
    %v485 = vunpack.c.l.b16 %v445
    %v486 = vunpack.c.l.b16 %v446
    %v487 = vunpack.c.l.b16 %v447
    %v488 = vunpack.c.l.b16 %v448
    %v489 = vunpack.c.l.b16 %v449
    %v490 = vunpack.c.l.b16 %v450
    %v491 = vunpack.c.l.b16 %v451
    %v492 = vunpack.c.l.b16 %v452
    %v493 = vunpack.c.l.b16 %v453
    %v494 = vpack.c.b16 %v479, %v478
    %v495 = vpack.c.b16 %v481, %v480
    %v496 = vpack.c.b16 %v483, %v482
    %v497 = vpack.c.b16 %v485, %v484
    %v498 = vpack.c.b16 %v487, %v486
    %v499 = vpack.c.b16 %v489, %v488
    %v500 = vpack.c.b16 %v491, %v490
    %v501 = vpack.c.b16 %v493, %v492
    %510 = vmatprep.subr.bf16.mxu0 0
    %511 = vmatpush1.bf16.msra.mxu0 %v494
    %512 = vmatprep.subr.bf16.mxu0 0
    %513 = vmatpush1.bf16.msra.mxu0 %v495
    %514 = vmatprep.subr.bf16.mxu0 0
    %515 = vmatpush1.bf16.msra.mxu0 %v496
    %516 = vmatprep.subr.bf16.mxu0 0
    %517 = vmatpush1.bf16.msra.mxu0 %v497
    %518 = vmatprep.subr.bf16.mxu0 0
    %519 = vmatpush1.bf16.msra.mxu0 %v498
    %520 = vmatprep.subr.bf16.mxu0 0
    %521 = vmatpush1.bf16.msra.mxu0 %v499
    %522 = vmatprep.subr.bf16.mxu0 0
    %523 = vmatpush1.bf16.msra.mxu0 %v500
    %524 = vmatprep.subr.bf16.mxu0 0
    %525 = vmatpush1.bf16.msra.mxu0 %v501
    %526 = vmatprep.subr.bf16.mxu0 0
    %527 = vmatpush1.bf16.msra.mxu0 0
    %528 = vmatprep.subr.bf16.mxu0 0
    %529 = vmatpush1.bf16.msra.mxu0 0
    %530 = vmatprep.subr.bf16.mxu0 0
    %531 = vmatpush1.bf16.msra.mxu0 0
    %532 = vmatprep.subr.bf16.mxu0 0
    %533 = vmatpush1.bf16.msra.mxu0 0
    %534 = vmatprep.subr.bf16.mxu0 0
    %535 = vmatpush1.bf16.msra.mxu0 0
    %536 = vmatprep.subr.bf16.mxu0 0
    %537 = vmatpush1.bf16.msra.mxu0 0
    %538 = vmatprep.subr.bf16.mxu0 0
    %539 = vmatpush1.bf16.msra.mxu0 0
    %540 = vmatprep.subr.bf16.mxu0 0
    %541 = vmatpush1.bf16.msra.mxu0 0
    %542 = vmatprep.mubr.bf16.mxu0 0
    %543 = vmatmul.mubr.bf16.gmra.mrb[0].mxu0 %v436
    %v544 = vpop.f32.mrb[0].mxu0
    %v545 = vadd.f32 %v460, %v544
    %v546 = vpop.f32.mrb[0].mxu0
    %v547 = vpop.f32.mrb[0].mxu0
    %v548 = vpop.f32.mrb[0].mxu0
    %549 = vdwg.mxu0
    %v550 = vtanh.pop %v545
    %v551 = vpack.c.bf16 %v550, %v550
    %v552 = vld [vmem:[#allocation5] sm:$0xf]
    %v553 = vld [vmem:[#allocation5 + $0x4] sm:$0xf]
    %v554 = vld [vmem:[#allocation5 + $0x8] sm:$0xf]
    %v555 = vld [vmem:[#allocation5 + $0xc] sm:$0xf]
    %v556 = vld [vmem:[#allocation5 + $0x10] sm:$0xf]
    %v557 = vld [vmem:[#allocation5 + $0x14] sm:$0xf]
    %v558 = vld [vmem:[#allocation5 + $0x18] sm:$0xf]
    %v559 = vld [vmem:[#allocation5 + $0x1c] sm:$0xf]
    %v560 = vld [vmem:[#allocation5 + $0x20] sm:$0xf]
    %v561 = vld [vmem:[#allocation5 + $0x24] sm:$0xf]
    %v562 = vld [vmem:[#allocation5 + $0x28] sm:$0xf]
    %v563 = vld [vmem:[#allocation5 + $0x2c] sm:$0xf]
    %v564 = vld [vmem:[#allocation5 + $0x30] sm:$0xf]
    %v565 = vld [vmem:[#allocation5 + $0x34] sm:$0xf]
    %v566 = vld [vmem:[#allocation5 + $0x38] sm:$0xf]
    %v567 = vld [vmem:[#allocation5 + $0x3c] sm:$0xf]
    %v568 = vld [vmem:[%s6] sm:$0x1]
    %v570 = vlaneseq
    %v571 = vshrl.u32 %v570, 7
    %v572 = vsub.s32 0, %v571
    %v573 = vrot.slane %v568, %v572
    %v591 = vunpack.c.l.b16 %v552
    %v592 = vunpack.c.l.b16 %v553
    %v593 = vunpack.c.l.b16 %v554
    %v594 = vunpack.c.l.b16 %v555
    %v595 = vunpack.c.l.b16 %v556
    %v596 = vunpack.c.l.b16 %v557
    %v597 = vunpack.c.l.b16 %v558
    %v598 = vunpack.c.l.b16 %v559
    %v599 = vunpack.c.l.b16 %v560
    %v600 = vunpack.c.l.b16 %v561
    %v601 = vunpack.c.l.b16 %v562
    %v602 = vunpack.c.l.b16 %v563
    %v603 = vunpack.c.l.b16 %v564
    %v604 = vunpack.c.l.b16 %v565
    %v605 = vunpack.c.l.b16 %v566
    %v606 = vunpack.c.l.b16 %v567
    %v607 = vpack.c.b16 %v592, %v591
    %v608 = vpack.c.b16 %v594, %v593
    %v609 = vpack.c.b16 %v596, %v595
    %v610 = vpack.c.b16 %v598, %v597
    %v611 = vpack.c.b16 %v600, %v599
    %v612 = vpack.c.b16 %v602, %v601
    %v613 = vpack.c.b16 %v604, %v603
    %v614 = vpack.c.b16 %v606, %v605
    %623 = vmatprep.subr.bf16.mxu0 0
    %624 = vmatpush1.bf16.msra.mxu0 %v607
    %625 = vmatprep.subr.bf16.mxu0 0
    %626 = vmatpush1.bf16.msra.mxu0 %v608
    %627 = vmatprep.subr.bf16.mxu0 0
    %628 = vmatpush1.bf16.msra.mxu0 %v609
    %629 = vmatprep.subr.bf16.mxu0 0
    %630 = vmatpush1.bf16.msra.mxu0 %v610
    %631 = vmatprep.subr.bf16.mxu0 0
    %632 = vmatpush1.bf16.msra.mxu0 %v611
    %633 = vmatprep.subr.bf16.mxu0 0
    %634 = vmatpush1.bf16.msra.mxu0 %v612
    %635 = vmatprep.subr.bf16.mxu0 0
    %636 = vmatpush1.bf16.msra.mxu0 %v613
    %637 = vmatprep.subr.bf16.mxu0 0
    %638 = vmatpush1.bf16.msra.mxu0 %v614
    %639 = vmatprep.subr.bf16.mxu0 0
    %640 = vmatpush1.bf16.msra.mxu0 0
    %641 = vmatprep.subr.bf16.mxu0 0
    %642 = vmatpush1.bf16.msra.mxu0 0
    %643 = vmatprep.subr.bf16.mxu0 0
    %644 = vmatpush1.bf16.msra.mxu0 0
    %645 = vmatprep.subr.bf16.mxu0 0
    %646 = vmatpush1.bf16.msra.mxu0 0
    %647 = vmatprep.subr.bf16.mxu0 0
    %648 = vmatpush1.bf16.msra.mxu0 0
    %649 = vmatprep.subr.bf16.mxu0 0
    %650 = vmatpush1.bf16.msra.mxu0 0
    %651 = vmatprep.subr.bf16.mxu0 0
    %652 = vmatpush1.bf16.msra.mxu0 0
    %653 = vmatprep.subr.bf16.mxu0 0
    %654 = vmatpush1.bf16.msra.mxu0 0
    %655 = vmatprep.mubr.bf16.mxu0 0
    %656 = vmatmul.mubr.bf16.gmra.mrb[0].mxu0 %v551
    %v657 = vpop.f32.mrb[0].mxu0
    %v658 = vadd.f32 %v573, %v657
    %v659 = vpop.f32.mrb[0].mxu0
    %v660 = vpop.f32.mrb[0].mxu0
    %v661 = vpop.f32.mrb[0].mxu0
    %662 = vdwg.mxu0
    %663 = vst [vmem:[#allocation7] sm:$0xff] %v658
    // Predicated region
    $region38: #{net_forward.1} parent=1 // pred_check
      _
    $region39: #{net_forward.1} parent=1 // pred_check_branch
      %665 = sbr.rel (0) target = $region41
    $region40: #{net_forward.1} parent=1 // pred_region
      %s667 = ssub.s32 128, 128
      %668 = vsyncadd [#allocation4], %s667
      %s670 = sshll.u32 [#allocation7], 4
      %s671 = int_to_ptr.vmem [resolvable:$true] %s670
      %673 = dma.vmem_to_hbm [thread:$0]  %s671, 128, %s7, [#allocation4]
    $region41: #{net_forward.1} parent=1 // pred_fallthru
      _
    // Predicated region
    $region42: #{net_forward.1} parent=1 // pred_check
      _
    $region43: #{net_forward.1} parent=1 // pred_check_branch
      %675 = sbr.rel (0) target = $region45
    $region44: #{net_forward.1} parent=1 // pred_region
      %676 = dma.done [#allocation4], 128
    $region45: #{net_forward.1} parent=1 // pred_fallthru
      _
    %677 = vsyncpa [#allocation3], 1
    %678 = vsyncpa [#allocation6], 1
    %679 = vsyncpa [#allocation4], 1

</llo_original>
